<compile_context>
chip_gen: v7x
topology: tpu7x:2x2x1
jax: 0.10.0
libtpu: 0.0.40
codegen_flags: <defaults>
</compile_context>

<pallas_src>
import jax
import jax.numpy as jnp
from jax.experimental import pallas as pl
from jax.experimental.pallas import tpu as pltpu

LANES = 128          # lane width; all feature dims are padded to this
NEG_BIG = -1.0e30    # bias for padded output lanes -> softmax prob exactly 0


def _round_up(x, m):
    return ((x + m - 1) // m) * m


def actor_kernel(x_ref, w_ref, b_ref, out_ref):
    x = x_ref[...]                       # (TB, 128) conv-folded packed input
    b = b_ref[...]                       # (2, 128)  [b1_eff ; b3 (pad = -1e30)]

    # Layer 1 (Conv1d folded into the weights): relu(x @ W1_eff + b1_eff)
    h1 = jnp.maximum(
        jnp.dot(x, w_ref[0], preferred_element_type=jnp.float32) + b[0:1, :],
        0.0)
    # Layer 2: relu(h1 @ W2t)
    h2 = jnp.maximum(
        jnp.dot(h1, w_ref[1], preferred_element_type=jnp.float32), 0.0)
    # Layer 3 + per-row softmax over the 128 lanes (padded lanes -> exp == 0).
    logits = jnp.dot(h2, w_ref[2], preferred_element_type=jnp.float32) + b[1:2, :]
    m = jnp.max(logits, axis=-1, keepdims=True)
    e = jnp.exp(logits - m)
    s = jnp.sum(e, axis=-1, keepdims=True)
    out_ref[...] = e * pl.reciprocal(s, approx=False)


def pack_params(params):
    """Fold the 1x1 conv into W1 and pack all weights/biases into two padded buffers."""
    conv_w, conv_b, W1, W2, W3, b3 = params
    H1, Ni = W1.shape
    H2 = W2.shape[0]
    O = W3.shape[0]
    assert 2 * Ni <= LANES and H1 <= LANES and H2 <= LANES and O <= LANES, (
        "this kernel assumes every layer width fits in one 128-lane tile")
    f32 = jnp.float32
    cw0 = conv_w[0, 0, 0].astype(f32)
    cw1 = conv_w[0, 1, 0].astype(f32)
    cb = conv_b[0].astype(f32)
    W1t = W1.T.astype(f32)                                      # (Ni, H1)
    W2t = W2.T.astype(f32)                                      # (H1, H2)
    W3t = W3.T.astype(f32)                                      # (H2, O)

    # Conv1d(2,1,1) fold: (x0*cw0 + x1*cw1 + cb) @ W1t
    #                   == [x0|x1] @ [cw0*W1t ; cw1*W1t] + cb*sum_rows(W1t)
    W1_eff = jnp.concatenate([cw0 * W1t, cw1 * W1t], axis=0)    # (2*Ni, H1)
    b1_eff = cb * jnp.sum(W1t, axis=0)                          # (H1,)

    def pad2(a):
        buf = jnp.zeros((LANES, LANES), f32)
        return buf.at[:a.shape[0], :a.shape[1]].set(a)

    w_all = jnp.stack([pad2(W1_eff), pad2(W2t), pad2(W3t)])     # (3, 128, 128)
    b1_pad = jnp.zeros((LANES,), f32).at[:H1].set(b1_eff)
    b3_pad = jnp.full((LANES,), NEG_BIG, f32).at[:O].set(b3.astype(f32))
    b_all = jnp.stack([b1_pad, b3_pad])                         # (2, 128)
    return w_all, b_all


def _forward_batch_impl(xb, params):
    conv_w, conv_b, W1, W2, W3, b3 = params
    Ni = W1.shape[1]
    O = W3.shape[0]
    B = xb.shape[0]

    w_all, b_all = pack_params(params)

    # Per-state torch.reshape(x, (-1, 2, 1)) — row-major pairs (ch0, ch1).
    xr = jnp.reshape(xb.astype(jnp.float32), (B, Ni, 2))
    x_packed = jnp.concatenate([xr[:, :, 0], xr[:, :, 1]], axis=-1)  # (B, 2*Ni)

    # Pad batch to a sublane/tile-friendly size and features to 128 lanes.
    TB = min(256, _round_up(B, 8))      # batch tile (v5e saturates at 128, v6e/v7x like 256)
    Bp = _round_up(B, TB)
    x_pad = jnp.zeros((Bp, LANES), jnp.float32).at[:B, :2 * Ni].set(x_packed)

    out = pl.pallas_call(
        actor_kernel,
        out_shape=jax.ShapeDtypeStruct((Bp, LANES), jnp.float32),
        grid_spec=pltpu.PrefetchScalarGridSpec(
            num_scalar_prefetch=0,
            grid=(Bp // TB,),
            in_specs=[
                pl.BlockSpec((TB, LANES), lambda i: (i, 0)),          # activations
                pl.BlockSpec((3, LANES, LANES), lambda i: (0, 0, 0)),  # weights (resident)
                pl.BlockSpec((2, LANES), lambda i: (0, 0)),            # biases  (resident)
            ],
            out_specs=pl.BlockSpec((TB, LANES), lambda i: (i, 0)),
        ),
        compiler_params=pltpu.CompilerParams(
            dimension_semantics=("parallel",)),   # batch tiles shard across TCs on v7x
    )(x_pad, w_all, b_all)
    return out[:B, :O]


actor_net_forward_batch = jax.jit(_forward_batch_impl)


def actor_net_forward(x, params):
    """Exact equivalent of the PyTorch ActorNet.forward for a single state."""
    probs = actor_net_forward_batch(jnp.reshape(x, (1, -1)), params)
    return probs[0]


def make_params(key, num_inputs, hidden1, hidden2, num_outputs):
    ks = jax.random.split(key, 6)
    # Deterministic synthetic init (PyTorch-like uniform +-1/sqrt(fan_in)).
    def u(k, shape, fan_in):
        bound = 1.0 / jnp.sqrt(float(fan_in))
        return jax.random.uniform(k, shape, jnp.float32, -bound, bound)
    conv_w = u(ks[0], (1, 2, 1), 2)
    conv_b = u(ks[1], (1,), 2)
    W1 = u(ks[2], (hidden1, num_inputs), num_inputs)
    W2 = u(ks[3], (hidden2, hidden1), hidden1)
    W3 = u(ks[4], (num_outputs, hidden2), hidden2)
    b3 = u(ks[5], (num_outputs,), hidden2)
    return conv_w, conv_b, W1, W2, W3, b3


def actor_net_reference(x, params):
    """Pure-JAX reference mirroring the PyTorch forward (single state)."""
    conv_w, conv_b, W1, W2, W3, b3 = params
    xr = jnp.reshape(x, (-1, 2, 1)).astype(jnp.float32)           # (Ni, 2, 1)
    v = (xr[:, 0, 0] * conv_w[0, 0, 0]
         + xr[:, 1, 0] * conv_w[0, 1, 0] + conv_b[0])             # (Ni,)
    h1 = jnp.maximum(W1 @ v, 0.0)
    h2 = jnp.maximum(W2 @ h1, 0.0)
    logits = W3 @ h2 + b3
    return jax.nn.softmax(logits, axis=0)


if __name__ == "__main__":
    num_inputs, hidden1, hidden2, num_outputs = 16, 32, 32, 8
    B = 64   # batch of rollout states

    key = jax.random.PRNGKey(0)
    k_x, k_p = jax.random.split(key)
    params = make_params(k_p, num_inputs, hidden1, hidden2, num_outputs)

    # B states; each state has 2*num_inputs elements, laid out like the
    # row-major torch.reshape(x, (-1, 2, 1)) expects.
    xb = jax.random.normal(k_x, (B, num_inputs, 2), jnp.float32)

    # Batched kernel forward.
    probs_b = jax.block_until_ready(actor_net_forward_batch(xb, params))
    assert probs_b.shape == (B, num_outputs)
    assert jnp.allclose(jnp.sum(probs_b, axis=-1), 1.0, atol=1e-5)

    # Per-state pure-JAX reference.
    ref_b = jnp.stack([actor_net_reference(xb[i], params) for i in range(B)])
    assert jnp.allclose(probs_b, ref_b, atol=1e-5, rtol=1e-5)

    # Single-state path matching the original PyTorch module signature.
    probs1 = jax.block_until_ready(actor_net_forward(xb[0], params))
    assert probs1.shape == (num_outputs,)
    assert jnp.allclose(probs1, actor_net_reference(xb[0], params),
                        atol=1e-5, rtol=1e-5)

    print("KERNEL_OK")
</pallas_src>

<mosaic_0001>
module attributes {stable_mosaic.version = 11 : i64} {
  func.func @actor_kernel(%arg0: i32, %arg1: memref<64x128xf32, #tpu.memory_space<vmem>>, %arg2: memref<3x128x128xf32, #tpu.memory_space<vmem>>, %arg3: memref<2x128xf32, #tpu.memory_space<vmem>>, %arg4: memref<64x128xf32, #tpu.memory_space<vmem>>) attributes {dimension_semantics = [#tpu.dimension_semantics<parallel>], iteration_bounds = array<i64: 1>, scalar_prefetch = 0 : i64, scratch_operands = 0 : i64, tpu.core_type = #tpu.core_type<tc>, window_params = [{transform_indices = @transform_0, window_bounds = array<i64: 64, 128>}, {pipeline_mode = #tpu.pipeline_mode<synchronous>, transform_indices = @transform_1, window_bounds = array<i64: 3, 128, 128>}, {pipeline_mode = #tpu.pipeline_mode<synchronous>, transform_indices = @transform_2, window_bounds = array<i64: 2, 128>}, {transform_indices = @transform_3, window_bounds = array<i64: 64, 128>}]} {
    %c0 = arith.constant 0 : index
    %c0_0 = arith.constant 0 : index
    %0 = vector.load %arg1[%c0, %c0_0] : memref<64x128xf32, #tpu.memory_space<vmem>>, vector<64x128xf32>
    %c0_1 = arith.constant 0 : index
    %c0_2 = arith.constant 0 : index
    %1 = vector.load %arg3[%c0_1, %c0_2] : memref<2x128xf32, #tpu.memory_space<vmem>>, vector<2x128xf32>
    %c0_3 = arith.constant 0 : index
    %c0_4 = arith.constant 0 : index
    %c0_5 = arith.constant 0 : index
    %2 = vector.load %arg2[%c0_3, %c0_4, %c0_5] : memref<3x128x128xf32, #tpu.memory_space<vmem>>, vector<1x128x128xf32>
    %3 = vector.shape_cast %2 : vector<1x128x128xf32> to vector<128x128xf32>
    %cst = arith.constant dense<0.000000e+00> : vector<64x128xf32>
    %4 = tpu.matmul %0, %3, %cst {dimension_numbers = #tpu.dot_dimension_numbers<[1], [0], [0], [1], [0, 0, 1, 1], [], []>} : vector<64x128xf32>, vector<128x128xf32>, vector<64x128xf32> -> vector<64x128xf32>
    %5 = vector.extract_strided_slice %1 {offsets = [0, 0], sizes = [1, 128], strides = [1, 1]} : vector<2x128xf32> to vector<1x128xf32>
    %6 = vector.broadcast %5 : vector<1x128xf32> to vector<64x128xf32>
    %7 = arith.addf %4, %6 : vector<64x128xf32>
    %cst_6 = arith.constant 0.000000e+00 : f32
    %8 = vector.broadcast %cst_6 : f32 to vector<64x128xf32>
    %9 = arith.maximumf %7, %8 : vector<64x128xf32>
    %c1 = arith.constant 1 : index
    %c0_7 = arith.constant 0 : index
    %c0_8 = arith.constant 0 : index
    %10 = vector.load %arg2[%c1, %c0_7, %c0_8] : memref<3x128x128xf32, #tpu.memory_space<vmem>>, vector<1x128x128xf32>
    %11 = vector.shape_cast %10 : vector<1x128x128xf32> to vector<128x128xf32>
    %cst_9 = arith.constant dense<0.000000e+00> : vector<64x128xf32>
    %12 = tpu.matmul %9, %11, %cst_9 {dimension_numbers = #tpu.dot_dimension_numbers<[1], [0], [0], [1], [0, 0, 1, 1], [], []>} : vector<64x128xf32>, vector<128x128xf32>, vector<64x128xf32> -> vector<64x128xf32>
    %cst_10 = arith.constant 0.000000e+00 : f32
    %13 = vector.broadcast %cst_10 : f32 to vector<64x128xf32>
    %14 = arith.maximumf %12, %13 : vector<64x128xf32>
    %c2 = arith.constant 2 : index
    %c0_11 = arith.constant 0 : index
    %c0_12 = arith.constant 0 : index
    %15 = vector.load %arg2[%c2, %c0_11, %c0_12] : memref<3x128x128xf32, #tpu.memory_space<vmem>>, vector<1x128x128xf32>
    %16 = vector.shape_cast %15 : vector<1x128x128xf32> to vector<128x128xf32>
    %cst_13 = arith.constant dense<0.000000e+00> : vector<64x128xf32>
    %17 = tpu.matmul %14, %16, %cst_13 {dimension_numbers = #tpu.dot_dimension_numbers<[1], [0], [0], [1], [0, 0, 1, 1], [], []>} : vector<64x128xf32>, vector<128x128xf32>, vector<64x128xf32> -> vector<64x128xf32>
    %18 = vector.extract_strided_slice %1 {offsets = [1, 0], sizes = [1, 128], strides = [1, 1]} : vector<2x128xf32> to vector<1x128xf32>
    %19 = vector.broadcast %18 : vector<1x128xf32> to vector<64x128xf32>
    %20 = arith.addf %17, %19 : vector<64x128xf32>
    %cst_14 = arith.constant dense<0xFF800000> : vector<64xf32>
    %21 = vector.multi_reduction <maximumf>, %20, %cst_14 [1] : vector<64x128xf32> to vector<64xf32>
    %22 = vector.shape_cast %21 : vector<64xf32> to vector<64x1xf32>
    %23 = vector.broadcast %22 : vector<64x1xf32> to vector<64x128xf32>
    %24 = arith.subf %20, %23 : vector<64x128xf32>
    %25 = math.exp %24 : vector<64x128xf32>
    %cst_15 = arith.constant dense<0.000000e+00> : vector<64xf32>
    %26 = vector.multi_reduction <add>, %25, %cst_15 [1] : vector<64x128xf32> to vector<64xf32>
    %27 = vector.shape_cast %26 : vector<64xf32> to vector<64x1xf32>
    %28 = tpu.reciprocal %27 : vector<64x1xf32> -> vector<64x1xf32>
    %29 = vector.broadcast %28 : vector<64x1xf32> to vector<64x128xf32>
    %30 = arith.mulf %25, %29 : vector<64x128xf32>
    %c0_16 = arith.constant 0 : index
    %c0_17 = arith.constant 0 : index
    %31 = vector.load %arg4[%c0_16, %c0_17] : memref<64x128xf32, #tpu.memory_space<vmem>>, vector<64x128xf32>
    tpu.vector_store %arg4[%c0_16, %c0_17], %30 {strides = array<i32>} : memref<64x128xf32, #tpu.memory_space<vmem>>, vector<64x128xf32>,
    return
  }
  func.func @transform_0(%arg0: i32) -> (i32, i32) {
    %c0_i32 = arith.constant 0 : i32
    %c0_i32_0 = arith.constant 0 : i32
    return %arg0, %c0_i32 : i32, i32
  }
  func.func @transform_1(%arg0: i32) -> (i32, i32, i32) {
    %c0_i32 = arith.constant 0 : i32
    %c0_i32_0 = arith.constant 0 : i32
    %c0_i32_1 = arith.constant 0 : i32
    %c0_i32_2 = arith.constant 0 : i32
    return %c0_i32, %c0_i32_0, %c0_i32_1 : i32, i32, i32
  }
  func.func @transform_2(%arg0: i32) -> (i32, i32) {
    %c0_i32 = arith.constant 0 : i32
    %c0_i32_0 = arith.constant 0 : i32
    %c0_i32_1 = arith.constant 0 : i32
    return %c0_i32, %c0_i32_0 : i32, i32
  }
  func.func @transform_3(%arg0: i32) -> (i32, i32) {
    %c0_i32 = arith.constant 0 : i32
    %c0_i32_0 = arith.constant 0 : i32
    return %arg0, %c0_i32 : i32, i32
  }
}

</mosaic_0001>

<llo_original>
// kernel: _forward_batch_impl.1
$region0: #{_forward_batch_impl.1}
  #allocation0 [shape = 'u32[]', space=smem, size = 0x4, offset = 0x4, fixed_abs, tag = 'smem constant byte address 0x4 - core index']
  #allocation1 [shape = 'u32[144,128]{1,0:T(1,128)}', space=vmem, size = 0x12000, scoped, tag = 'internal scratch']
  %s0 = inlined_call_operand.vmem [shape: f32[64,128], index: 0, kind: input, shape index: {}]
  %s1 = inlined_call_operand.vmem [shape: f32[3,128,128], index: 1, kind: input, shape index: {}]
  %s2 = inlined_call_operand.vmem [shape: f32[2,128], index: 2, kind: input, shape index: {}]
  %s3 = inlined_call_operand.vmem [shape: f32[64,128], index: 3, kind: output, shape index: {}]
  %s4 = sld [smem:[#allocation0]]
  $region22: #{_forward_batch_impl.1} parent=0
    _
  %s6 = ssub.s32 1, %s4
  %s7 = scalar_select 0, %s6, %s4
  // Predicated region
  $region2: #{_forward_batch_impl.1} parent=0 // pred_check
    _
  $region3: #{_forward_batch_impl.1} parent=0 // pred_check_branch
    %9 = sbr.rel (0) target = $region5
  $region4: #{_forward_batch_impl.1} parent=0 // pred_region
    _
  $region5: #{_forward_batch_impl.1} parent=0 // pred_fallthru
    _
  // Predicated region
  $region6: #{_forward_batch_impl.1} parent=0 // pred_check
    _
  $region7: #{_forward_batch_impl.1} parent=0 // pred_check_branch
    %11 = sbr.rel (0) target = $region9
  $region8: #{_forward_batch_impl.1} parent=0 // pred_region
    _
  $region9: #{_forward_batch_impl.1} parent=0 // pred_fallthru
    _
  // Predicated region
  $region10: #{_forward_batch_impl.1} parent=0 // pred_check
    _
  $region11: #{_forward_batch_impl.1} parent=0 // pred_check_branch
    %13 = sbr.rel (0) target = $region13
  $region12: #{_forward_batch_impl.1} parent=0 // pred_region
    _
  $region13: #{_forward_batch_impl.1} parent=0 // pred_fallthru
    _
  %v14 = vld [vmem:[%s0] sm:$0xff]
  %v15 = vld [vmem:[%s0 + $0x8] sm:$0xff]
  %v16 = vld [vmem:[%s0 + $0x10] sm:$0xff]
  %v17 = vld [vmem:[%s0 + $0x18] sm:$0xff]
  %v18 = vld [vmem:[%s0 + $0x20] sm:$0xff]
  %v19 = vld [vmem:[%s0 + $0x28] sm:$0xff]
  %v20 = vld [vmem:[%s0 + $0x30] sm:$0xff]
  %v21 = vld [vmem:[%s0 + $0x38] sm:$0xff]
  %v22 = vld [vmem:[%s2] sm:$0x3]
  %v23 = vld [vmem:[%s1] sm:$0xff]
  %v24 = vld [vmem:[%s1 + $0x8] sm:$0xff]
  %v25 = vld [vmem:[%s1 + $0x10] sm:$0xff]
  %v26 = vld [vmem:[%s1 + $0x18] sm:$0xff]
  %v27 = vld [vmem:[%s1 + $0x20] sm:$0xff]
  %v28 = vld [vmem:[%s1 + $0x28] sm:$0xff]
  %v29 = vld [vmem:[%s1 + $0x30] sm:$0xff]
  %v30 = vld [vmem:[%s1 + $0x38] sm:$0xff]
  %v31 = vld [vmem:[%s1 + $0x40] sm:$0xff]
  %v32 = vld [vmem:[%s1 + $0x48] sm:$0xff]
  %v33 = vld [vmem:[%s1 + $0x50] sm:$0xff]
  %v34 = vld [vmem:[%s1 + $0x58] sm:$0xff]
  %v35 = vld [vmem:[%s1 + $0x60] sm:$0xff]
  %v36 = vld [vmem:[%s1 + $0x68] sm:$0xff]
  %v37 = vld [vmem:[%s1 + $0x70] sm:$0xff]
  %v38 = vld [vmem:[%s1 + $0x78] sm:$0xff]
  %v39 = vlaneseq
  %v40 = vshrl.u32 %v39, 7
  %v41 = vsub.s32 0, %v40
  %v42 = vrot.slane %v22, %v41
  %43 = vmatprep.subr.mxu0 0.0
  %44 = vmatpush1.msra.mxu0 %v23
  %45 = vmatprep.subr.mxu0 0.0
  %46 = vmatpush1.msra.mxu0 %v24
  %47 = vmatprep.subr.mxu0 0.0
  %48 = vmatpush1.msra.mxu0 %v25
  %49 = vmatprep.subr.mxu0 0.0
  %50 = vmatpush1.msra.mxu0 %v26
  %51 = vmatprep.subr.mxu0 0.0
  %52 = vmatpush1.msra.mxu0 %v27
  %53 = vmatprep.subr.mxu0 0.0
  %54 = vmatpush1.msra.mxu0 %v28
  %55 = vmatprep.subr.mxu0 0.0
  %56 = vmatpush1.msra.mxu0 %v29
  %57 = vmatprep.subr.mxu0 0.0
  %58 = vmatpush1.msra.mxu0 %v30
  %59 = vmatprep.subr.mxu0 0.0
  %60 = vmatpush1.msra.mxu0 %v31
  %61 = vmatprep.subr.mxu0 0.0
  %62 = vmatpush1.msra.mxu0 %v32
  %63 = vmatprep.subr.mxu0 0.0
  %64 = vmatpush1.msra.mxu0 %v33
  %65 = vmatprep.subr.mxu0 0.0
  %66 = vmatpush1.msra.mxu0 %v34
  %67 = vmatprep.subr.mxu0 0.0
  %68 = vmatpush1.msra.mxu0 %v35
  %69 = vmatprep.subr.mxu0 0.0
  %70 = vmatpush1.msra.mxu0 %v36
  %71 = vmatprep.subr.mxu0 0.0
  %72 = vmatpush1.msra.mxu0 %v37
  %73 = vmatprep.subr.mxu0 0.0
  %74 = vmatpush1.msra.mxu0 %v38
  %75 = vmatprep.subr.mxu0 0.0
  %76 = vmatpush1.msra.mxu0 0.0
  %77 = vmatprep.subr.mxu0 0.0
  %78 = vmatpush1.msra.mxu0 0.0
  %79 = vmatprep.subr.mxu0 0.0
  %80 = vmatpush1.msra.mxu0 0.0
  %81 = vmatprep.subr.mxu0 0.0
  %82 = vmatpush1.msra.mxu0 0.0
  %83 = vmatprep.subr.mxu0 0.0
  %84 = vmatpush1.msra.mxu0 0.0
  %85 = vmatprep.subr.mxu0 0.0
  %86 = vmatpush1.msra.mxu0 0.0
  %87 = vmatprep.subr.mxu0 0.0
  %88 = vmatpush1.msra.mxu0 0.0
  %89 = vmatprep.subr.mxu0 0.0
  %90 = vmatpush1.msra.mxu0 0.0
  %91 = vmatprep.subr.mxu0 0.0
  %92 = vmatpush1.msra.mxu0 0.0
  %93 = vmatprep.subr.mxu0 0.0
  %94 = vmatpush1.msra.mxu0 0.0
  %95 = vmatprep.subr.mxu0 0.0
  %96 = vmatpush1.msra.mxu0 0.0
  %97 = vmatprep.subr.mxu0 0.0
  %98 = vmatpush1.msra.mxu0 0.0
  %99 = vmatprep.subr.mxu0 0.0
  %100 = vmatpush1.msra.mxu0 0.0
  %101 = vmatprep.subr.mxu0 0.0
  %102 = vmatpush1.msra.mxu0 0.0
  %103 = vmatprep.subr.mxu0 0.0
  %104 = vmatpush1.msra.mxu0 0.0
  %105 = vmatprep.subr.mxu0 0.0
  %106 = vmatpush1.msra.mxu0 0.0
  %107 = vmatprep.mubr.f32.mxu0 0.0
  %108 = vmatmul.mubr.f32.gmra.mrb[0].mxu0 %v14
  %v109 = vpop.f32.mrb[0].mxu0
  %v110 = vadd.f32 %v42, %v109
  %v111 = vpop.f32.mrb[0].mxu0
  %112 = vmatprep.mubr.f32.mxu0 0.0
  %113 = vmatmul.mubr.f32.gmra.mrb[0].mxu0 %v15
  %v114 = vpop.f32.mrb[0].mxu0
  %v115 = vadd.f32 %v42, %v114
  %v116 = vpop.f32.mrb[0].mxu0
  %117 = vmatprep.mubr.f32.mxu0 0.0
  %118 = vmatmul.mubr.f32.gmra.mrb[0].mxu0 %v16
  %v119 = vpop.f32.mrb[0].mxu0
  %v120 = vadd.f32 %v42, %v119
  %v121 = vpop.f32.mrb[0].mxu0
  %122 = vmatprep.mubr.f32.mxu0 0.0
  %123 = vmatmul.mubr.f32.gmra.mrb[0].mxu0 %v17
  %v124 = vpop.f32.mrb[0].mxu0
  %v125 = vadd.f32 %v42, %v124
  %v126 = vpop.f32.mrb[0].mxu0
  %127 = vmatprep.mubr.f32.mxu0 0.0
  %128 = vmatmul.mubr.f32.gmra.mrb[0].mxu0 %v18
  %v129 = vpop.f32.mrb[0].mxu0
  %v130 = vadd.f32 %v42, %v129
  %v131 = vpop.f32.mrb[0].mxu0
  %132 = vmatprep.mubr.f32.mxu0 0.0
  %133 = vmatmul.mubr.f32.gmra.mrb[0].mxu0 %v19
  %v134 = vpop.f32.mrb[0].mxu0
  %v135 = vadd.f32 %v42, %v134
  %v136 = vpop.f32.mrb[0].mxu0
  %137 = vmatprep.mubr.f32.mxu0 0.0
  %138 = vmatmul.mubr.f32.gmra.mrb[0].mxu0 %v20
  %v139 = vpop.f32.mrb[0].mxu0
  %v140 = vadd.f32 %v42, %v139
  %v141 = vpop.f32.mrb[0].mxu0
  %142 = vmatprep.mubr.f32.mxu0 0.0
  %143 = vmatmul.mubr.f32.gmra.mrb[0].mxu0 %v21
  %v144 = vpop.f32.mrb[0].mxu0
  %v145 = vadd.f32 %v42, %v144
  %v146 = vpop.f32.mrb[0].mxu0
  %147 = vdwg.mxu0
  %v148 = vmax.f32 %v110, 0.0
  %v149 = vmax.f32 %v115, 0.0
  %v150 = vmax.f32 %v120, 0.0
  %v151 = vmax.f32 %v125, 0.0
  %v152 = vmax.f32 %v130, 0.0
  %v153 = vmax.f32 %v135, 0.0
  %v154 = vmax.f32 %v140, 0.0
  %v155 = vmax.f32 %v145, 0.0
  %s156 = scalar_lea.vmem %s1, 128
  %v157 = vld [vmem:[%s156] sm:$0xff]
  %v158 = vld [vmem:[%s156 + $0x8] sm:$0xff]
  %v159 = vld [vmem:[%s156 + $0x10] sm:$0xff]
  %v160 = vld [vmem:[%s156 + $0x18] sm:$0xff]
  %v161 = vld [vmem:[%s156 + $0x20] sm:$0xff]
  %v162 = vld [vmem:[%s156 + $0x28] sm:$0xff]
  %v163 = vld [vmem:[%s156 + $0x30] sm:$0xff]
  %v164 = vld [vmem:[%s156 + $0x38] sm:$0xff]
  %v165 = vld [vmem:[%s156 + $0x40] sm:$0xff]
  %v166 = vld [vmem:[%s156 + $0x48] sm:$0xff]
  %v167 = vld [vmem:[%s156 + $0x50] sm:$0xff]
  %v168 = vld [vmem:[%s156 + $0x58] sm:$0xff]
  %v169 = vld [vmem:[%s156 + $0x60] sm:$0xff]
  %v170 = vld [vmem:[%s156 + $0x68] sm:$0xff]
  %v171 = vld [vmem:[%s156 + $0x70] sm:$0xff]
  %v172 = vld [vmem:[%s156 + $0x78] sm:$0xff]
  %173 = vmatprep.subr.mxu0 0.0
  %174 = vmatpush1.msra.mxu0 %v157
  %175 = vmatprep.subr.mxu0 0.0
  %176 = vmatpush1.msra.mxu0 %v158
  %177 = vmatprep.subr.mxu0 0.0
  %178 = vmatpush1.msra.mxu0 %v159
  %179 = vmatprep.subr.mxu0 0.0
  %180 = vmatpush1.msra.mxu0 %v160
  %181 = vmatprep.subr.mxu0 0.0
  %182 = vmatpush1.msra.mxu0 %v161
  %183 = vmatprep.subr.mxu0 0.0
  %184 = vmatpush1.msra.mxu0 %v162
  %185 = vmatprep.subr.mxu0 0.0
  %186 = vmatpush1.msra.mxu0 %v163
  %187 = vmatprep.subr.mxu0 0.0
  %188 = vmatpush1.msra.mxu0 %v164
  %189 = vmatprep.subr.mxu0 0.0
  %190 = vmatpush1.msra.mxu0 %v165
  %191 = vmatprep.subr.mxu0 0.0
  %192 = vmatpush1.msra.mxu0 %v166
  %193 = vmatprep.subr.mxu0 0.0
  %194 = vmatpush1.msra.mxu0 %v167
  %195 = vmatprep.subr.mxu0 0.0
  %196 = vmatpush1.msra.mxu0 %v168
  %197 = vmatprep.subr.mxu0 0.0
  %198 = vmatpush1.msra.mxu0 %v169
  %199 = vmatprep.subr.mxu0 0.0
  %200 = vmatpush1.msra.mxu0 %v170
  %201 = vmatprep.subr.mxu0 0.0
  %202 = vmatpush1.msra.mxu0 %v171
  %203 = vmatprep.subr.mxu0 0.0
  %204 = vmatpush1.msra.mxu0 %v172
  %205 = vmatprep.subr.mxu0 0.0
  %206 = vmatpush1.msra.mxu0 0.0
  %207 = vmatprep.subr.mxu0 0.0
  %208 = vmatpush1.msra.mxu0 0.0
  %209 = vmatprep.subr.mxu0 0.0
  %210 = vmatpush1.msra.mxu0 0.0
  %211 = vmatprep.subr.mxu0 0.0
  %212 = vmatpush1.msra.mxu0 0.0
  %213 = vmatprep.subr.mxu0 0.0
  %214 = vmatpush1.msra.mxu0 0.0
  %215 = vmatprep.subr.mxu0 0.0
  %216 = vmatpush1.msra.mxu0 0.0
  %217 = vmatprep.subr.mxu0 0.0
  %218 = vmatpush1.msra.mxu0 0.0
  %219 = vmatprep.subr.mxu0 0.0
  %220 = vmatpush1.msra.mxu0 0.0
  %221 = vmatprep.subr.mxu0 0.0
  %222 = vmatpush1.msra.mxu0 0.0
  %223 = vmatprep.subr.mxu0 0.0
  %224 = vmatpush1.msra.mxu0 0.0
  %225 = vmatprep.subr.mxu0 0.0
  %226 = vmatpush1.msra.mxu0 0.0
  %227 = vmatprep.subr.mxu0 0.0
  %228 = vmatpush1.msra.mxu0 0.0
  %229 = vmatprep.subr.mxu0 0.0
  %230 = vmatpush1.msra.mxu0 0.0
  %231 = vmatprep.subr.mxu0 0.0
  %232 = vmatpush1.msra.mxu0 0.0
  %233 = vmatprep.subr.mxu0 0.0
  %234 = vmatpush1.msra.mxu0 0.0
  %235 = vmatprep.subr.mxu0 0.0
  %236 = vmatpush1.msra.mxu0 0.0
  %237 = vmatprep.mubr.f32.mxu0 0.0
  %238 = vmatmul.mubr.f32.gmra.mrb[0].mxu0 %v148
  %v239 = vpop.f32.mrb[0].mxu0
  %v240 = vadd.f32 0.0, %v239
  %v241 = vpop.f32.mrb[0].mxu0
  %242 = vmatprep.mubr.f32.mxu0 0.0
  %243 = vmatmul.mubr.f32.gmra.mrb[0].mxu0 %v149
  %v244 = vpop.f32.mrb[0].mxu0
  %v245 = vadd.f32 0.0, %v244
  %v246 = vpop.f32.mrb[0].mxu0
  %247 = vmatprep.mubr.f32.mxu0 0.0
  %248 = vmatmul.mubr.f32.gmra.mrb[0].mxu0 %v150
  %v249 = vpop.f32.mrb[0].mxu0
  %v250 = vadd.f32 0.0, %v249
  %v251 = vpop.f32.mrb[0].mxu0
  %252 = vmatprep.mubr.f32.mxu0 0.0
  %253 = vmatmul.mubr.f32.gmra.mrb[0].mxu0 %v151
  %v254 = vpop.f32.mrb[0].mxu0
  %v255 = vadd.f32 0.0, %v254
  %v256 = vpop.f32.mrb[0].mxu0
  %257 = vmatprep.mubr.f32.mxu0 0.0
  %258 = vmatmul.mubr.f32.gmra.mrb[0].mxu0 %v152
  %v259 = vpop.f32.mrb[0].mxu0
  %v260 = vadd.f32 0.0, %v259
  %v261 = vpop.f32.mrb[0].mxu0
  %262 = vmatprep.mubr.f32.mxu0 0.0
  %263 = vmatmul.mubr.f32.gmra.mrb[0].mxu0 %v153
  %v264 = vpop.f32.mrb[0].mxu0
  %v265 = vadd.f32 0.0, %v264
  %v266 = vpop.f32.mrb[0].mxu0
  %267 = vmatprep.mubr.f32.mxu0 0.0
  %268 = vmatmul.mubr.f32.gmra.mrb[0].mxu0 %v154
  %v269 = vpop.f32.mrb[0].mxu0
  %v270 = vadd.f32 0.0, %v269
  %v271 = vpop.f32.mrb[0].mxu0
  %272 = vmatprep.mubr.f32.mxu0 0.0
  %273 = vmatmul.mubr.f32.gmra.mrb[0].mxu0 %v155
  %v274 = vpop.f32.mrb[0].mxu0
  %v275 = vadd.f32 0.0, %v274
  %v276 = vpop.f32.mrb[0].mxu0
  %277 = vdwg.mxu0
  %v278 = vmax.f32 %v240, 0.0
  %v279 = vmax.f32 %v245, 0.0
  %v280 = vmax.f32 %v250, 0.0
  %v281 = vmax.f32 %v255, 0.0
  %v282 = vmax.f32 %v260, 0.0
  %v283 = vmax.f32 %v265, 0.0
  %v284 = vmax.f32 %v270, 0.0
  %v285 = vmax.f32 %v275, 0.0
  %s286 = scalar_lea.vmem %s1, 256
  %v287 = vld [vmem:[%s286] sm:$0xff]
  %v288 = vld [vmem:[%s286 + $0x8] sm:$0xff]
  %v289 = vld [vmem:[%s286 + $0x10] sm:$0xff]
  %v290 = vld [vmem:[%s286 + $0x18] sm:$0xff]
  %v291 = vld [vmem:[%s286 + $0x20] sm:$0xff]
  %v292 = vld [vmem:[%s286 + $0x28] sm:$0xff]
  %v293 = vld [vmem:[%s286 + $0x30] sm:$0xff]
  %v294 = vld [vmem:[%s286 + $0x38] sm:$0xff]
  %v295 = vld [vmem:[%s286 + $0x40] sm:$0xff]
  %v296 = vld [vmem:[%s286 + $0x48] sm:$0xff]
  %v297 = vld [vmem:[%s286 + $0x50] sm:$0xff]
  %v298 = vld [vmem:[%s286 + $0x58] sm:$0xff]
  %v299 = vld [vmem:[%s286 + $0x60] sm:$0xff]
  %v300 = vld [vmem:[%s286 + $0x68] sm:$0xff]
  %v301 = vld [vmem:[%s286 + $0x70] sm:$0xff]
  %v302 = vld [vmem:[%s286 + $0x78] sm:$0xff]
  %v303 = vlaneseq
  %v304 = vshrl.u32 %v303, 7
  %v305 = vsub.s32 1, %v304
  %v306 = vrot.slane %v22, %v305
  %307 = vmatprep.subr.mxu0 0.0
  %308 = vmatpush1.msra.mxu0 %v287
  %309 = vmatprep.subr.mxu0 0.0
  %310 = vmatpush1.msra.mxu0 %v288
  %311 = vmatprep.subr.mxu0 0.0
  %312 = vmatpush1.msra.mxu0 %v289
  %313 = vmatprep.subr.mxu0 0.0
  %314 = vmatpush1.msra.mxu0 %v290
  %315 = vmatprep.subr.mxu0 0.0
  %316 = vmatpush1.msra.mxu0 %v291
  %317 = vmatprep.subr.mxu0 0.0
  %318 = vmatpush1.msra.mxu0 %v292
  %319 = vmatprep.subr.mxu0 0.0
  %320 = vmatpush1.msra.mxu0 %v293
  %321 = vmatprep.subr.mxu0 0.0
  %322 = vmatpush1.msra.mxu0 %v294
  %323 = vmatprep.subr.mxu0 0.0
  %324 = vmatpush1.msra.mxu0 %v295
  %325 = vmatprep.subr.mxu0 0.0
  %326 = vmatpush1.msra.mxu0 %v296
  %327 = vmatprep.subr.mxu0 0.0
  %328 = vmatpush1.msra.mxu0 %v297
  %329 = vmatprep.subr.mxu0 0.0
  %330 = vmatpush1.msra.mxu0 %v298
  %331 = vmatprep.subr.mxu0 0.0
  %332 = vmatpush1.msra.mxu0 %v299
  %333 = vmatprep.subr.mxu0 0.0
  %334 = vmatpush1.msra.mxu0 %v300
  %335 = vmatprep.subr.mxu0 0.0
  %336 = vmatpush1.msra.mxu0 %v301
  %337 = vmatprep.subr.mxu0 0.0
  %338 = vmatpush1.msra.mxu0 %v302
  %339 = vmatprep.subr.mxu0 0.0
  %340 = vmatpush1.msra.mxu0 0.0
  %341 = vmatprep.subr.mxu0 0.0
  %342 = vmatpush1.msra.mxu0 0.0
  %343 = vmatprep.subr.mxu0 0.0
  %344 = vmatpush1.msra.mxu0 0.0
  %345 = vmatprep.subr.mxu0 0.0
  %346 = vmatpush1.msra.mxu0 0.0
  %347 = vmatprep.subr.mxu0 0.0
  %348 = vmatpush1.msra.mxu0 0.0
  %349 = vmatprep.subr.mxu0 0.0
  %350 = vmatpush1.msra.mxu0 0.0
  %351 = vmatprep.subr.mxu0 0.0
  %352 = vmatpush1.msra.mxu0 0.0
  %353 = vmatprep.subr.mxu0 0.0
  %354 = vmatpush1.msra.mxu0 0.0
  %355 = vmatprep.subr.mxu0 0.0
  %356 = vmatpush1.msra.mxu0 0.0
  %357 = vmatprep.subr.mxu0 0.0
  %358 = vmatpush1.msra.mxu0 0.0
  %359 = vmatprep.subr.mxu0 0.0
  %360 = vmatpush1.msra.mxu0 0.0
  %361 = vmatprep.subr.mxu0 0.0
  %362 = vmatpush1.msra.mxu0 0.0
  %363 = vmatprep.subr.mxu0 0.0
  %364 = vmatpush1.msra.mxu0 0.0
  %365 = vmatprep.subr.mxu0 0.0
  %366 = vmatpush1.msra.mxu0 0.0
  %367 = vmatprep.subr.mxu0 0.0
  %368 = vmatpush1.msra.mxu0 0.0
  %369 = vmatprep.subr.mxu0 0.0
  %370 = vmatpush1.msra.mxu0 0.0
  %371 = vmatprep.mubr.f32.mxu0 0.0
  %372 = vmatmul.mubr.f32.gmra.mrb[0].mxu0 %v278
  %v373 = vpop.f32.mrb[0].mxu0
  %v374 = vadd.f32 %v306, %v373
  %v375 = vpop.f32.mrb[0].mxu0
  %376 = vmatprep.mubr.f32.mxu0 0.0
  %377 = vmatmul.mubr.f32.gmra.mrb[0].mxu0 %v279
  %v378 = vpop.f32.mrb[0].mxu0
  %v379 = vadd.f32 %v306, %v378
  %v380 = vpop.f32.mrb[0].mxu0
  %381 = vmatprep.mubr.f32.mxu0 0.0
  %382 = vmatmul.mubr.f32.gmra.mrb[0].mxu0 %v280
  %v383 = vpop.f32.mrb[0].mxu0
  %v384 = vadd.f32 %v306, %v383
  %v385 = vpop.f32.mrb[0].mxu0
  %386 = vmatprep.mubr.f32.mxu0 0.0
  %387 = vmatmul.mubr.f32.gmra.mrb[0].mxu0 %v281
  %v388 = vpop.f32.mrb[0].mxu0
  %v389 = vadd.f32 %v306, %v388
  %v390 = vpop.f32.mrb[0].mxu0
  %391 = vmatprep.mubr.f32.mxu0 0.0
  %392 = vmatmul.mubr.f32.gmra.mrb[0].mxu0 %v282
  %v393 = vpop.f32.mrb[0].mxu0
  %v394 = vadd.f32 %v306, %v393
  %v395 = vpop.f32.mrb[0].mxu0
  %396 = vmatprep.mubr.f32.mxu0 0.0
  %397 = vmatmul.mubr.f32.gmra.mrb[0].mxu0 %v283
  %v398 = vpop.f32.mrb[0].mxu0
  %v399 = vadd.f32 %v306, %v398
  %v400 = vpop.f32.mrb[0].mxu0
  %401 = vmatprep.mubr.f32.mxu0 0.0
  %402 = vmatmul.mubr.f32.gmra.mrb[0].mxu0 %v284
  %v403 = vpop.f32.mrb[0].mxu0
  %v404 = vadd.f32 %v306, %v403
  %v405 = vpop.f32.mrb[0].mxu0
  %406 = vmatprep.mubr.f32.mxu0 0.0
  %407 = vmatmul.mubr.f32.gmra.mrb[0].mxu0 %v285
  %v408 = vpop.f32.mrb[0].mxu0
  %v409 = vadd.f32 %v306, %v408
  %v410 = vpop.f32.mrb[0].mxu0
  %411 = vdwg.mxu0
  %412 = vmax.xlane.f32.xlu0 %v374
  %v413 = vpop.xlane.xlu0 %412
  %414 = vmax.xlane.f32.xlu0 %v379
  %v415 = vpop.xlane.xlu0 %414
  %416 = vmax.xlane.f32.xlu0 %v384
  %v417 = vpop.xlane.xlu0 %416
  %418 = vmax.xlane.f32.xlu0 %v389
  %v419 = vpop.xlane.xlu0 %418
  %420 = vmax.xlane.f32.xlu0 %v394
  %v421 = vpop.xlane.xlu0 %420
  %422 = vmax.xlane.f32.xlu0 %v399
  %v423 = vpop.xlane.xlu0 %422
  %424 = vmax.xlane.f32.xlu0 %v404
  %v425 = vpop.xlane.xlu0 %424
  %426 = vmax.xlane.f32.xlu0 %v409
  %v427 = vpop.xlane.xlu0 %426
  %v428 = vsub.f32 %v374, %v413
  %v429 = vsub.f32 %v379, %v415
  %v430 = vsub.f32 %v384, %v417
  %v431 = vsub.f32 %v389, %v419
  %v432 = vsub.f32 %v394, %v421
  %v433 = vsub.f32 %v399, %v423
  %v434 = vsub.f32 %v404, %v425
  %v435 = vsub.f32 %v409, %v427
  %v436 = vmul.f32 %v428, 1.442695
  %v437 = vpow.pop %v436
  %v438 = vmul.f32 %v429, 1.442695
  %v439 = vpow.pop %v438
  %v440 = vmul.f32 %v430, 1.442695
  %v441 = vpow.pop %v440
  %v442 = vmul.f32 %v431, 1.442695
  %v443 = vpow.pop %v442
  %v444 = vmul.f32 %v432, 1.442695
  %v445 = vpow.pop %v444
  %v446 = vmul.f32 %v433, 1.442695
  %v447 = vpow.pop %v446
  %v448 = vmul.f32 %v434, 1.442695
  %v449 = vpow.pop %v448
  %v450 = vmul.f32 %v435, 1.442695
  %v451 = vpow.pop %v450
  %452 = vadd.xlane.f32.xlu0 %v437
  %v453 = vpop.xlane.xlu0 %452
  %454 = vadd.xlane.f32.xlu0 %v439
  %v455 = vpop.xlane.xlu0 %454
  %456 = vadd.xlane.f32.xlu0 %v441
  %v457 = vpop.xlane.xlu0 %456
  %458 = vadd.xlane.f32.xlu0 %v443
  %v459 = vpop.xlane.xlu0 %458
  %460 = vadd.xlane.f32.xlu0 %v445
  %v461 = vpop.xlane.xlu0 %460
  %462 = vadd.xlane.f32.xlu0 %v447
  %v463 = vpop.xlane.xlu0 %462
  %464 = vadd.xlane.f32.xlu0 %v449
  %v465 = vpop.xlane.xlu0 %464
  %466 = vadd.xlane.f32.xlu0 %v451
  %v467 = vpop.xlane.xlu0 %466
  %v468 = vrcp.pop %v453
  %v469 = vrcp.pop %v455
  %v470 = vrcp.pop %v457
  %v471 = vrcp.pop %v459
  %v472 = vrcp.pop %v461
  %v473 = vrcp.pop %v463
  %v474 = vrcp.pop %v465
  %v475 = vrcp.pop %v467
  %v476 = vmul.f32 %v437, %v468
  %v477 = vmul.f32 %v439, %v469
  %v478 = vmul.f32 %v441, %v470
  %v479 = vmul.f32 %v443, %v471
  %v480 = vmul.f32 %v445, %v472
  %v481 = vmul.f32 %v447, %v473
  %v482 = vmul.f32 %v449, %v474
  %v483 = vmul.f32 %v451, %v475
  %484 = vst [vmem:[%s3] sm:$0xff] %v476
  %485 = vst [vmem:[%s3 + $0x8] sm:$0xff] %v477
  %486 = vst [vmem:[%s3 + $0x10] sm:$0xff] %v478
  %487 = vst [vmem:[%s3 + $0x18] sm:$0xff] %v479
  %488 = vst [vmem:[%s3 + $0x20] sm:$0xff] %v480
  %489 = vst [vmem:[%s3 + $0x28] sm:$0xff] %v481
  %490 = vst [vmem:[%s3 + $0x30] sm:$0xff] %v482
  %491 = vst [vmem:[%s3 + $0x38] sm:$0xff] %v483
  // Predicated region
  $region14: #{_forward_batch_impl.1} parent=0 // pred_check
    _
  $region15: #{_forward_batch_impl.1} parent=0 // pred_check_branch
    %493 = sbr.rel (0) target = $region17
  $region16: #{_forward_batch_impl.1} parent=0 // pred_region
    _
  $region17: #{_forward_batch_impl.1} parent=0 // pred_fallthru
    _
  // Predicated region
  $region18: #{_forward_batch_impl.1} parent=0 // pred_check
    _
  $region19: #{_forward_batch_impl.1} parent=0 // pred_check_branch
    %495 = sbr.rel (0) target = $region21
  $region20: #{_forward_batch_impl.1} parent=0 // pred_region
    _
  $region21: #{_forward_batch_impl.1} parent=0 // pred_fallthru
    _

</llo_original>
